<compile_context>
chip_gen: v7x
topology: tpu7x:2x2x1
jax: 0.10.0
libtpu: 0.0.40
codegen_flags: <defaults>
</compile_context>

<pallas_src>
import functools

import jax
import jax.numpy as jnp
from jax.experimental import pallas as pl
from jax.experimental.pallas import tpu as pltpu


def smoothed_ensemble_kernel(x_ref, pert_ref, w_ref, bsum_ref, votes_ref):
    """One batch tile of the fused smoothing + ensemble soft-vote forward.

    x_ref    : (TB, M*F)  bf16  raw input, tiled M times along the feature axis
    pert_ref : (TB, M*F)  bf16  sigma*smoothing_noise + per-member augmentation
    w_ref    : (M*F, Kp)  bf16  member-stacked linear classifier weights (K padded)
    bsum_ref : (1, Kp)    f32   sum over members of classifier biases (padded)
    votes_ref: (TB, Kp)   f32   summed soft class votes (lane-dense, sliced outside)
    """
    # member input construction for ALL members at once (VPU):
    #   lhs[b, m*F:(m+1)*F] = x[b] + sigma*noise[b] + aug[m, b]
    lhs = x_ref[...] + pert_ref[...]
    # all M base models + vote sum = ONE wide MXU matmul (contraction depth M*F),
    # f32 accumulation; ensemble bias added once.
    votes_ref[...] = (
        jnp.dot(lhs, w_ref[...], preferred_element_type=jnp.float32) + bsum_ref[...]
    )


def prepare_params(weights, biases):
    """Parameter-init-time prep (done once, NOT in the per-call path).

    weights: (M, F, K) -> member-stacked, K zero-padded to 128, bf16 (M*F, K_PAD)
    biases : (M, K)    -> summed over members, zero-padded, f32 (1, K_PAD)
    """
    M, F, K = weights.shape
    K_PAD = max(128, ((K + 127) // 128) * 128)  # exactly 128 for small K
    w_flat = (
        jnp.pad(weights.astype(jnp.float32), ((0, 0), (0, 0), (0, K_PAD - K)))
        .reshape(M * F, K_PAD)
        .astype(jnp.bfloat16)
    )
    b_sum = jnp.pad(
        biases.astype(jnp.float32).sum(axis=0), (0, K_PAD - K)
    ).reshape(1, K_PAD)
    return w_flat, b_sum


@functools.partial(jax.jit, static_argnames=("num_classes",))
def smoothed_model_forward(x, smooth_noise, aug_perturb, w_flat, b_sum, sigma,
                           *, num_classes):
    """x: (B, C, L); smooth_noise: (B, C, L); aug_perturb: (M, B, C, L);
    w_flat: (M*F, K_PAD) bf16; b_sum: (1, K_PAD) f32.  Returns (B, num_classes) f32."""
    B, C, L = x.shape
    F = C * L
    M = aug_perturb.shape[0]
    MF, K_PAD = w_flat.shape
    assert MF == M * F

    x2 = x.reshape(B, F).astype(jnp.float32)
    ns2 = smooth_noise.reshape(B, F).astype(jnp.float32)
    aug2 = jnp.transpose(aug_perturb.reshape(M, B, F).astype(jnp.float32), (1, 0, 2))

    # member-stacked LHS pieces (contraction axis M*F): column block m = member m input
    x_tiled = jnp.broadcast_to(x2[:, None, :], (B, M, F)).reshape(B, MF)
    pert = ((sigma * ns2)[:, None, :] + aug2).reshape(B, MF)   # smoothing + member aug

    # pad batch rows to a sublane-friendly tile; sweep tiles with a 'parallel' grid axis
    TB = min(max(8, ((B + 7) // 8) * 8), 256)
    B_pad = ((B + TB - 1) // TB) * TB
    x_tiled = jnp.pad(x_tiled, ((0, B_pad - B), (0, 0))).astype(jnp.bfloat16)
    pert = jnp.pad(pert, ((0, B_pad - B), (0, 0))).astype(jnp.bfloat16)

    votes_pad = pl.pallas_call(
        smoothed_ensemble_kernel,
        out_shape=jax.ShapeDtypeStruct((B_pad, K_PAD), jnp.float32),
        grid=(B_pad // TB,),
        in_specs=[
            pl.BlockSpec((TB, MF), lambda i: (i, 0)),      # x (tiled over members)
            pl.BlockSpec((TB, MF), lambda i: (i, 0)),      # smoothing + member aug
            pl.BlockSpec((MF, K_PAD), lambda i: (0, 0)),   # stacked member weights
            pl.BlockSpec((1, K_PAD), lambda i: (0, 0)),    # summed bias
        ],
        out_specs=pl.BlockSpec((TB, K_PAD), lambda i: (i, 0)),
        compiler_params=pltpu.CompilerParams(
            dimension_semantics=("parallel",),             # batch tiles -> both v7x TCs
            vmem_limit_bytes=32 * 1024 * 1024,
        ),
    )(x_tiled, pert, w_flat, b_sum)

    return votes_pad[:B, :num_classes]


if __name__ == "__main__":
    # small, deterministic problem sizes implied by the module
    B, C, L = 2, 4, 16          # batch, channels, seq length  (input_shape / x_len)
    K = 8                       # num_classes
    M = 2                       # ensemble members (len(common_info_list))
    F = C * L
    SIGMA = 0.8                 # Smmothed_Model sigma

    key = jax.random.PRNGKey(0)
    k_x, k_s, k_g, k_gm, k_j, k_jm, k_w, k_b = jax.random.split(key, 8)

    x = jax.random.normal(k_x, (B, C, L), jnp.float32)
    smooth_noise = jax.random.normal(k_s, (B, C, L), jnp.float32)

    # gaussian_noise aug: p=0.9, amplitude=0.2 (per-sample Bernoulli gate)
    gauss = 0.2 * jax.random.normal(k_g, (M, B, C, L), jnp.float32)
    gmask = (jax.random.uniform(k_gm, (M, B, 1, 1)) < 0.9).astype(jnp.float32)
    # Jitter aug: p=0.5, amplitude=0.2 (uniform jitter, per-sample Bernoulli gate)
    jit_noise = jax.random.uniform(k_j, (M, B, C, L), jnp.float32, minval=-0.2, maxval=0.2)
    jmask = (jax.random.uniform(k_jm, (M, B, 1, 1)) < 0.5).astype(jnp.float32)
    aug_perturb = gmask * gauss + jmask * jit_noise  # (M, B, C, L)

    # deterministic synthetic base-model parameters (linear classifier per member)
    weights = 0.05 * jax.random.normal(k_w, (M, F, K), jnp.float32)
    biases = 0.05 * jax.random.normal(k_b, (M, K), jnp.float32)

    # parameter-init-time prep (padded/flattened weights, summed bias) -- done once
    w_flat, b_sum = prepare_params(weights, biases)

    votes = smoothed_model_forward(x, smooth_noise, aug_perturb, w_flat, b_sum,
                                   jnp.float32(SIGMA), num_classes=K)
    votes = jax.block_until_ready(votes)

    # pure-JAX f32 reference for correctness
    # (kernel feeds the MXU in bf16 with f32 accumulation -> slightly looser tolerance)
    x_s = x.reshape(B, F) + SIGMA * smooth_noise.reshape(B, F)
    ref = jnp.zeros((B, K), jnp.float32)
    for m in range(M):
        ref = ref + (x_s + aug_perturb[m].reshape(B, F)) @ weights[m] + biases[m]
    assert votes.shape == (B, K)
    assert jnp.allclose(votes, ref, atol=5e-2, rtol=0.0), "mismatch vs reference"

    print("KERNEL_OK")
</pallas_src>

<mosaic_0001>
module attributes {stable_mosaic.version = 11 : i64} {
  func.func @smoothed_ensemble_kernel(%arg0: i32, %arg1: memref<8x128xbf16, #tpu.memory_space<vmem>>, %arg2: memref<8x128xbf16, #tpu.memory_space<vmem>>, %arg3: memref<128x128xbf16, #tpu.memory_space<vmem>>, %arg4: memref<1x128xf32, #tpu.memory_space<vmem>>, %arg5: memref<8x128xf32, #tpu.memory_space<vmem>>) attributes {dimension_semantics = [#tpu.dimension_semantics<parallel>], iteration_bounds = array<i64: 1>, scalar_prefetch = 0 : i64, scratch_operands = 0 : i64, tpu.core_type = #tpu.core_type<tc>, window_params = [{transform_indices = @transform_0, window_bounds = array<i64: 8, 128>}, {transform_indices = @transform_1, window_bounds = array<i64: 8, 128>}, {pipeline_mode = #tpu.pipeline_mode<synchronous>, transform_indices = @transform_2, window_bounds = array<i64: 128, 128>}, {pipeline_mode = #tpu.pipeline_mode<synchronous>, transform_indices = @transform_3, window_bounds = array<i64: 1, 128>}, {transform_indices = @transform_4, window_bounds = array<i64: 8, 128>}]} {
    %c0 = arith.constant 0 : index
    %c0_0 = arith.constant 0 : index
    %0 = vector.load %arg1[%c0, %c0_0] : memref<8x128xbf16, #tpu.memory_space<vmem>>, vector<8x128xbf16>
    %c0_1 = arith.constant 0 : index
    %c0_2 = arith.constant 0 : index
    %1 = vector.load %arg2[%c0_1, %c0_2] : memref<8x128xbf16, #tpu.memory_space<vmem>>, vector<8x128xbf16>
    %2 = arith.addf %0, %1 : vector<8x128xbf16>
    %c0_3 = arith.constant 0 : index
    %c0_4 = arith.constant 0 : index
    %3 = vector.load %arg3[%c0_3, %c0_4] : memref<128x128xbf16, #tpu.memory_space<vmem>>, vector<128x128xbf16>
    %cst = arith.constant dense<0.000000e+00> : vector<8x128xf32>
    %4 = tpu.matmul %2, %3, %cst {dimension_numbers = #tpu.dot_dimension_numbers<[1], [0], [0], [1], [0, 0, 1, 1], [], []>} : vector<8x128xbf16>, vector<128x128xbf16>, vector<8x128xf32> -> vector<8x128xf32>
    %c0_5 = arith.constant 0 : index
    %c0_6 = arith.constant 0 : index
    %5 = vector.load %arg4[%c0_5, %c0_6] : memref<1x128xf32, #tpu.memory_space<vmem>>, vector<1x128xf32>
    %6 = vector.broadcast %5 : vector<1x128xf32> to vector<8x128xf32>
    %7 = arith.addf %4, %6 : vector<8x128xf32>
    %c0_7 = arith.constant 0 : index
    %c0_8 = arith.constant 0 : index
    %8 = vector.load %arg5[%c0_7, %c0_8] : memref<8x128xf32, #tpu.memory_space<vmem>>, vector<8x128xf32>
    tpu.vector_store %arg5[%c0_7, %c0_8], %7 {strides = array<i32>} : memref<8x128xf32, #tpu.memory_space<vmem>>, vector<8x128xf32>,
    return
  }
  func.func @transform_0(%arg0: i32) -> (i32, i32) {
    %c0_i32 = arith.constant 0 : i32
    %c0_i32_0 = arith.constant 0 : i32
    return %arg0, %c0_i32 : i32, i32
  }
  func.func @transform_1(%arg0: i32) -> (i32, i32) {
    %c0_i32 = arith.constant 0 : i32
    %c0_i32_0 = arith.constant 0 : i32
    return %arg0, %c0_i32 : i32, i32
  }
  func.func @transform_2(%arg0: i32) -> (i32, i32) {
    %c0_i32 = arith.constant 0 : i32
    %c0_i32_0 = arith.constant 0 : i32
    %c0_i32_1 = arith.constant 0 : i32
    return %c0_i32, %c0_i32_0 : i32, i32
  }
  func.func @transform_3(%arg0: i32) -> (i32, i32) {
    %c0_i32 = arith.constant 0 : i32
    %c0_i32_0 = arith.constant 0 : i32
    %c0_i32_1 = arith.constant 0 : i32
    return %c0_i32, %c0_i32_0 : i32, i32
  }
  func.func @transform_4(%arg0: i32) -> (i32, i32) {
    %c0_i32 = arith.constant 0 : i32
    %c0_i32_0 = arith.constant 0 : i32
    return %arg0, %c0_i32 : i32, i32
  }
}

</mosaic_0001>

<llo_original>
// kernel: smoothed_model_forward.1
$region0: #{smoothed_model_forward.1}
  #allocation0 [shape = 'u32[]', space=smem, size = 0x4, offset = 0x4, fixed_abs, tag = 'smem constant byte address 0x4 - core index']
  #allocation1 [shape = 'u32[144,128]{1,0:T(1,128)}', space=vmem, size = 0x12000, scoped, tag = 'internal scratch']
  %s0 = inlined_call_operand.vmem [shape: bf16[8,128], index: 0, kind: input, shape index: {}]
  %s1 = inlined_call_operand.vmem [shape: bf16[8,128], index: 1, kind: input, shape index: {}]
  %s2 = inlined_call_operand.vmem [shape: bf16[128,128], index: 2, kind: input, shape index: {}]
  %s3 = inlined_call_operand.vmem [shape: f32[1,128], index: 3, kind: input, shape index: {}]
  %s4 = inlined_call_operand.vmem [shape: f32[8,128], index: 4, kind: output, shape index: {}]
  %s5 = sld [smem:[#allocation0]]
  $region26: #{smoothed_model_forward.1} parent=0
    _
  %s7 = ssub.s32 1, %s5
  %s8 = scalar_select 0, %s7, %s5
  // Predicated region
  $region2: #{smoothed_model_forward.1} parent=0 // pred_check
    _
  $region3: #{smoothed_model_forward.1} parent=0 // pred_check_branch
    %10 = sbr.rel (0) target = $region5
  $region4: #{smoothed_model_forward.1} parent=0 // pred_region
    _
  $region5: #{smoothed_model_forward.1} parent=0 // pred_fallthru
    _
  // Predicated region
  $region6: #{smoothed_model_forward.1} parent=0 // pred_check
    _
  $region7: #{smoothed_model_forward.1} parent=0 // pred_check_branch
    %12 = sbr.rel (0) target = $region9
  $region8: #{smoothed_model_forward.1} parent=0 // pred_region
    _
  $region9: #{smoothed_model_forward.1} parent=0 // pred_fallthru
    _
  // Predicated region
  $region10: #{smoothed_model_forward.1} parent=0 // pred_check
    _
  $region11: #{smoothed_model_forward.1} parent=0 // pred_check_branch
    %14 = sbr.rel (0) target = $region13
  $region12: #{smoothed_model_forward.1} parent=0 // pred_region
    _
  $region13: #{smoothed_model_forward.1} parent=0 // pred_fallthru
    _
  // Predicated region
  $region14: #{smoothed_model_forward.1} parent=0 // pred_check
    _
  $region15: #{smoothed_model_forward.1} parent=0 // pred_check_branch
    %16 = sbr.rel (0) target = $region17
  $region16: #{smoothed_model_forward.1} parent=0 // pred_region
    _
  $region17: #{smoothed_model_forward.1} parent=0 // pred_fallthru
    _
  %v18 = vld [vmem:[%s0] sm:$0xf]
  %v19 = vld [vmem:[%s1] sm:$0xf]
  %v20 = vadd.bf16 %v18, %v19
  %v21 = vld [vmem:[%s2] sm:$0xf]
  %v22 = vld [vmem:[%s2 + $0x4] sm:$0xf]
  %v23 = vld [vmem:[%s2 + $0x8] sm:$0xf]
  %v24 = vld [vmem:[%s2 + $0xc] sm:$0xf]
  %v25 = vld [vmem:[%s2 + $0x10] sm:$0xf]
  %v26 = vld [vmem:[%s2 + $0x14] sm:$0xf]
  %v27 = vld [vmem:[%s2 + $0x18] sm:$0xf]
  %v28 = vld [vmem:[%s2 + $0x1c] sm:$0xf]
  %v29 = vld [vmem:[%s2 + $0x20] sm:$0xf]
  %v30 = vld [vmem:[%s2 + $0x24] sm:$0xf]
  %v31 = vld [vmem:[%s2 + $0x28] sm:$0xf]
  %v32 = vld [vmem:[%s2 + $0x2c] sm:$0xf]
  %v33 = vld [vmem:[%s2 + $0x30] sm:$0xf]
  %v34 = vld [vmem:[%s2 + $0x34] sm:$0xf]
  %v35 = vld [vmem:[%s2 + $0x38] sm:$0xf]
  %v36 = vld [vmem:[%s2 + $0x3c] sm:$0xf]
  %v37 = vld [vmem:[%s3] sm:$0x1]
  %v39 = vlaneseq
  %v40 = vshrl.u32 %v39, 7
  %v41 = vsub.s32 0, %v40
  %v42 = vrot.slane %v37, %v41
  %v60 = vunpack.c.l.b16 %v21
  %v61 = vunpack.c.l.b16 %v22
  %v62 = vunpack.c.l.b16 %v23
  %v63 = vunpack.c.l.b16 %v24
  %v64 = vunpack.c.l.b16 %v25
  %v65 = vunpack.c.l.b16 %v26
  %v66 = vunpack.c.l.b16 %v27
  %v67 = vunpack.c.l.b16 %v28
  %v68 = vunpack.c.l.b16 %v29
  %v69 = vunpack.c.l.b16 %v30
  %v70 = vunpack.c.l.b16 %v31
  %v71 = vunpack.c.l.b16 %v32
  %v72 = vunpack.c.l.b16 %v33
  %v73 = vunpack.c.l.b16 %v34
  %v74 = vunpack.c.l.b16 %v35
  %v75 = vunpack.c.l.b16 %v36
  %v76 = vpack.c.b16 %v61, %v60
  %v77 = vpack.c.b16 %v63, %v62
  %v78 = vpack.c.b16 %v65, %v64
  %v79 = vpack.c.b16 %v67, %v66
  %v80 = vpack.c.b16 %v69, %v68
  %v81 = vpack.c.b16 %v71, %v70
  %v82 = vpack.c.b16 %v73, %v72
  %v83 = vpack.c.b16 %v75, %v74
  %92 = vmatprep.subr.bf16.mxu0 0
  %93 = vmatpush1.bf16.msra.mxu0 %v76
  %94 = vmatprep.subr.bf16.mxu0 0
  %95 = vmatpush1.bf16.msra.mxu0 %v77
  %96 = vmatprep.subr.bf16.mxu0 0
  %97 = vmatpush1.bf16.msra.mxu0 %v78
  %98 = vmatprep.subr.bf16.mxu0 0
  %99 = vmatpush1.bf16.msra.mxu0 %v79
  %100 = vmatprep.subr.bf16.mxu0 0
  %101 = vmatpush1.bf16.msra.mxu0 %v80
  %102 = vmatprep.subr.bf16.mxu0 0
  %103 = vmatpush1.bf16.msra.mxu0 %v81
  %104 = vmatprep.subr.bf16.mxu0 0
  %105 = vmatpush1.bf16.msra.mxu0 %v82
  %106 = vmatprep.subr.bf16.mxu0 0
  %107 = vmatpush1.bf16.msra.mxu0 %v83
  %108 = vmatprep.subr.bf16.mxu0 0
  %109 = vmatpush1.bf16.msra.mxu0 0
  %110 = vmatprep.subr.bf16.mxu0 0
  %111 = vmatpush1.bf16.msra.mxu0 0
  %112 = vmatprep.subr.bf16.mxu0 0
  %113 = vmatpush1.bf16.msra.mxu0 0
  %114 = vmatprep.subr.bf16.mxu0 0
  %115 = vmatpush1.bf16.msra.mxu0 0
  %116 = vmatprep.subr.bf16.mxu0 0
  %117 = vmatpush1.bf16.msra.mxu0 0
  %118 = vmatprep.subr.bf16.mxu0 0
  %119 = vmatpush1.bf16.msra.mxu0 0
  %120 = vmatprep.subr.bf16.mxu0 0
  %121 = vmatpush1.bf16.msra.mxu0 0
  %122 = vmatprep.subr.bf16.mxu0 0
  %123 = vmatpush1.bf16.msra.mxu0 0
  %124 = vmatprep.mubr.bf16.mxu0 0
  %125 = vmatmul.mubr.bf16.gmra.mrb[0].mxu0 %v20
  %v126 = vpop.f32.mrb[0].mxu0
  %v127 = vadd.f32 %v42, %v126
  %v128 = vpop.f32.mrb[0].mxu0
  %v129 = vpop.f32.mrb[0].mxu0
  %v130 = vpop.f32.mrb[0].mxu0
  %131 = vdwg.mxu0
  %132 = vst [vmem:[%s4] sm:$0xff] %v127
  // Predicated region
  $region18: #{smoothed_model_forward.1} parent=0 // pred_check
    _
  $region19: #{smoothed_model_forward.1} parent=0 // pred_check_branch
    %134 = sbr.rel (0) target = $region21
  $region20: #{smoothed_model_forward.1} parent=0 // pred_region
    _
  $region21: #{smoothed_model_forward.1} parent=0 // pred_fallthru
    _
  // Predicated region
  $region22: #{smoothed_model_forward.1} parent=0 // pred_check
    _
  $region23: #{smoothed_model_forward.1} parent=0 // pred_check_branch
    %136 = sbr.rel (0) target = $region25
  $region24: #{smoothed_model_forward.1} parent=0 // pred_region
    _
  $region25: #{smoothed_model_forward.1} parent=0 // pred_fallthru
    _

</llo_original>
